<compile_context>
chip_gen: v7x
topology: tpu7x:2x2x1
jax: 0.10.0
libtpu: 0.0.40
codegen_flags: <defaults>
</compile_context>

<pallas_src>
import jax
import jax.numpy as jnp
from jax import lax
from jax.experimental import pallas as pl
from jax.experimental.pallas import tpu as pltpu


# ----------------------------------------------------------------------------
# Fused kernel body (one attention instance per grid step)
# ----------------------------------------------------------------------------
def _make_attention_kernel(kernel_self_attention: bool):
    def kernel(x_ref, w_ref, b_ref, scal_ref, out_ref, att_ref):
        x = x_ref[...]                                   # (N, C) f32, rows = (length, in_dim)
        n, c = x.shape
        c8 = (w_ref.shape[1] - c) // 2                   # in_dim // 8

        # Fused Q|K|V projection: 1x1 Conv1d == dense layer over channels.
        # bf16 MXU inputs, f32 accumulation; one MXU pass instead of three.
        xb = x.astype(jnp.bfloat16)
        qkv = jnp.dot(xb, w_ref[...], preferred_element_type=jnp.float32) + b_ref[...]
        q = qkv[:, :c8]                                  # (N, C//8) f32
        k = qkv[:, c8:2 * c8]                            # (N, C//8) f32
        v = qkv[:, 2 * c8:]                              # (N, C)    f32

        if kernel_self_attention:
            # energy[j, i] = exp(-relu(gamma_att) * ||q_j - k_i||^2)
            # Keep these dots in f32: the ||.||^2 decomposition cancels and feeds exp.
            qk = lax.dot_general(q, k, (((1,), (1,)), ((), ())),
                                 preferred_element_type=jnp.float32)          # (N, N)
            q2 = jnp.sum(q * q, axis=-1, keepdims=True)                       # (N, 1)
            # ||k_i||^2 broadcast along rows via a ones-matmul (no transpose needed).
            k2 = lax.dot_general(jnp.ones((n, c8), jnp.float32), k * k,
                                 (((1,), (1,)), ((), ())),
                                 preferred_element_type=jnp.float32)          # (N, N)
            dist2 = q2 + k2 - 2.0 * qk
            gamma_att = jnp.maximum(scal_ref[1], 0.0)                         # relu(gamma_att)
            energy = jnp.exp(-gamma_att * dist2)
        else:
            # energy[j, i] = <q_j, k_i>  -- bf16 MXU inputs, contract axis 1 of both
            # operands directly (no k.T relayout), f32 accumulation.
            energy = lax.dot_general(q.astype(jnp.bfloat16), k.astype(jnp.bfloat16),
                                     (((1,), (1,)), ((), ())),
                                     preferred_element_type=jnp.float32)      # (N, N)

        # Numerically-stable softmax over keys; reciprocal on the (otherwise idle) EUP slot.
        m = jnp.max(energy, axis=-1, keepdims=True)
        e = jnp.exp(energy - m)
        s = jnp.sum(e, axis=-1, keepdims=True)
        att = e * pl.reciprocal(s, approx=True)
        att_ref[...] = att

        # out = att @ V (bf16 MXU inputs, f32 acc); then gamma * out + x residual.
        o = jnp.dot(att.astype(jnp.bfloat16), v.astype(jnp.bfloat16),
                    preferred_element_type=jnp.float32)                        # (N, C)
        out_ref[...] = scal_ref[0] * o + x

    return kernel


def _vmem_limit_bytes(n, c, ctot):
    # Resident blocks (double-buffered) + compute temporaries, with generous slack.
    blk = n * c * 4 * 2                      # x block
    blk += c * ctot * 2 * 2                  # fused bf16 weight
    blk += 8 * max(ctot, 128) * 4 * 2        # bias tile (padded to (8,128))
    blk += n * c * 4 * 2 + n * n * 4 * 2     # out / att blocks
    temps = 6 * n * max(ctot, 128) * 4       # qkv / q / k / v / energy temporaries
    return int(min(64 * 1024 * 1024, max(4 * 1024 * 1024, 8 * (blk + temps))))


# ----------------------------------------------------------------------------
# Batched wrapper: x (B, N, C) -> out (B, N, C), att (B, N, N)
# ----------------------------------------------------------------------------
def self_attention_forward_batched(params, x, kernel_self_attention=False):
    B, N, C = x.shape
    w = params["w_qkv"]                       # (C, 2*C//8 + C) bf16
    b = params["b_qkv"]                       # (1, 2*C//8 + C) f32
    ctot = w.shape[1]
    scalars = jnp.concatenate([params["gamma"].astype(jnp.float32),
                               params["gamma_att"].astype(jnp.float32)])  # (2,) -> SMEM

    out, att = pl.pallas_call(
        _make_attention_kernel(kernel_self_attention),
        out_shape=(
            jax.ShapeDtypeStruct((B, N, C), jnp.float32),
            jax.ShapeDtypeStruct((B, N, N), jnp.float32),
        ),
        grid=(B,),
        in_specs=[
            pl.BlockSpec((None, N, C), lambda bi: (bi, 0, 0)),                  # x (per-instance)
            pl.BlockSpec((C, ctot), lambda bi: (0, 0)),                         # fused W (resident)
            pl.BlockSpec((1, ctot), lambda bi: (0, 0)),                         # fused bias
            pl.BlockSpec(memory_space=pltpu.MemorySpace.SMEM),                  # [gamma, gamma_att]
        ],
        out_specs=(
            pl.BlockSpec((None, N, C), lambda bi: (bi, 0, 0)),
            pl.BlockSpec((None, N, N), lambda bi: (bi, 0, 0)),
        ),
        compiler_params=pltpu.CompilerParams(
            dimension_semantics=("parallel",),               # shard batch across TCs (v7x)
            vmem_limit_bytes=_vmem_limit_bytes(N, C, ctot),
        ),
    )(x, w, b, scalars)
    return out, att


# ----------------------------------------------------------------------------
# Module-equivalent forward: x (length, in_dim) -> same outputs as torch module
# ----------------------------------------------------------------------------
def self_attention_forward(params, x, kernel_self_attention=False):
    """Returns (out (N, C), attention (1, N, N), gamma (1,), gamma_att (1,)),
    matching SelfAttention.forward's (out[0].permute(1,0), attention, gamma, gamma_att)."""
    out, att = self_attention_forward_batched(params, x[None], kernel_self_attention)
    return out[0], att, params["gamma"], params["gamma_att"]


# ----------------------------------------------------------------------------
# Parameter init (Conv1d-style uniform init; gamma / gamma_att init to 1)
# ----------------------------------------------------------------------------
def init_params(key, in_dim):
    c8 = in_dim // 8
    ks = jax.random.split(key, 6)
    bound = 1.0 / (in_dim ** 0.5)

    def w(k, fan_out):
        # stored transposed (in, out) for row-layout matmul
        return jax.random.uniform(k, (in_dim, fan_out), jnp.float32, -bound, bound)

    def b(k, fan_out):
        return jax.random.uniform(k, (1, fan_out), jnp.float32, -bound, bound)

    wq, wk, wv = w(ks[0], c8), w(ks[2], c8), w(ks[4], in_dim)
    bq, bk, bv = b(ks[1], c8), b(ks[3], c8), b(ks[5], in_dim)
    return {
        # fused [Wq | Wk | Wv]; bf16 storage halves weight DMA bytes, bf16-native MXU
        "w_qkv": jnp.concatenate([wq, wk, wv], axis=1).astype(jnp.bfloat16),
        "b_qkv": jnp.concatenate([bq, bk, bv], axis=1),
        "gamma": jnp.ones((1,), jnp.float32),
        "gamma_att": jnp.ones((1,), jnp.float32),
    }


# ----------------------------------------------------------------------------
# Pure-JAX references
# ----------------------------------------------------------------------------
def reference_forward(params, x, kernel_self_attention=False):
    """Same math + same bf16 casts as the kernel (tight self-check)."""
    w, b = params["w_qkv"], params["b_qkv"]
    C = x.shape[1]
    c8 = (w.shape[1] - C) // 2
    xb = x.astype(jnp.bfloat16)
    qkv = jnp.dot(xb, w, preferred_element_type=jnp.float32) + b
    q, k, v = qkv[:, :c8], qkv[:, c8:2 * c8], qkv[:, 2 * c8:]
    if kernel_self_attention:
        ga = jnp.maximum(params["gamma_att"][0], 0.0)
        qk = q @ k.T
        q2 = jnp.sum(q * q, axis=-1, keepdims=True)
        k2 = jnp.sum(k * k, axis=-1, keepdims=True).T
        energy = jnp.exp(-ga * (q2 + k2 - 2.0 * qk))
    else:
        energy = jnp.dot(q.astype(jnp.bfloat16), k.astype(jnp.bfloat16).T,
                         preferred_element_type=jnp.float32)
    att = jax.nn.softmax(energy, axis=-1)
    o = jnp.dot(att.astype(jnp.bfloat16), v.astype(jnp.bfloat16),
                preferred_element_type=jnp.float32)
    return params["gamma"][0] * o + x, att


def reference_forward_f32(params, x, kernel_self_attention=False):
    """All-f32 torch-semantics reference (loose check against the bf16 kernel)."""
    w, b = params["w_qkv"].astype(jnp.float32), params["b_qkv"]
    C = x.shape[1]
    c8 = (w.shape[1] - C) // 2
    qkv = x @ w + b
    q, k, v = qkv[:, :c8], qkv[:, c8:2 * c8], qkv[:, 2 * c8:]
    if kernel_self_attention:
        ga = jnp.maximum(params["gamma_att"][0], 0.0)
        d = q[:, None, :] - k[None, :, :]
        energy = jnp.exp(-ga * jnp.sum(d * d, axis=-1))
    else:
        energy = q @ k.T
    att = jax.nn.softmax(energy, axis=-1)
    return params["gamma"][0] * (att @ v) + x, att


# ----------------------------------------------------------------------------
if __name__ == "__main__":
    key = jax.random.PRNGKey(0)
    k_param, k_data = jax.random.split(key)

    N, C = 8, 64                      # length (sequence of instances), in_dim
    params = init_params(k_param, C)
    x = jax.random.uniform(k_data, (N, C), jnp.float32)

    # --- module-equivalent single-instance call: dot-product attention ---
    out, attention, gamma, gamma_att = self_attention_forward(params, x, False)
    jax.block_until_ready((out, attention))
    out_ref, att_ref = reference_forward(params, x, False)
    out_f32, att_f32 = reference_forward_f32(params, x, False)

    assert out.shape == (N, C)
    assert attention.shape == (1, N, N)
    assert gamma.shape == (1,) and gamma_att.shape == (1,)
    assert bool(jnp.all(jnp.isfinite(out)))
    assert bool(jnp.all(jnp.abs(jnp.sum(attention, axis=-1) - 1.0) < 1e-2))
    assert bool(jnp.allclose(attention[0], att_ref, atol=1e-2, rtol=1e-2))
    assert bool(jnp.allclose(out, out_ref, atol=1e-2, rtol=1e-2))
    assert bool(jnp.allclose(out, out_f32, atol=5e-2, rtol=5e-2))

    # --- Gaussian-kernel attention path (kernel_self_attention=True) ---
    out_k, att_k, _, _ = self_attention_forward(params, x, True)
    jax.block_until_ready((out_k, att_k))
    outk_ref, attk_ref = reference_forward(params, x, True)
    outk_f32, attk_f32 = reference_forward_f32(params, x, True)
    assert bool(jnp.all(jnp.isfinite(out_k)))
    assert bool(jnp.allclose(att_k[0], attk_ref, atol=1e-2, rtol=1e-2))
    assert bool(jnp.allclose(out_k, outk_ref, atol=1e-2, rtol=1e-2))
    assert bool(jnp.allclose(out_k, outk_f32, atol=5e-2, rtol=5e-2))

    # --- batched path (amortizes launch overhead; "parallel" grid axis for v7x) ---
    B = 4
    xb = jax.random.uniform(jax.random.PRNGKey(1), (B, N, C), jnp.float32)
    out_b, att_b = self_attention_forward_batched(params, xb, False)
    jax.block_until_ready((out_b, att_b))
    assert out_b.shape == (B, N, C) and att_b.shape == (B, N, N)
    for i in range(B):
        o_r, a_r = reference_forward(params, xb[i], False)
        assert bool(jnp.allclose(out_b[i], o_r, atol=1e-2, rtol=1e-2))
        assert bool(jnp.allclose(att_b[i], a_r, atol=1e-2, rtol=1e-2))

    print("KERNEL_OK")
</pallas_src>

<mosaic_0001>
module attributes {stable_mosaic.version = 11 : i64} {
  func.func @kernel(%arg0: i32, %arg1: memref<1x8x64xf32, #tpu.memory_space<vmem>>, %arg2: memref<64x80xbf16, #tpu.memory_space<vmem>>, %arg3: memref<1x80xf32, #tpu.memory_space<vmem>>, %arg4: memref<2xf32, #tpu.memory_space<smem>>, %arg5: memref<1x8x64xf32, #tpu.memory_space<vmem>>, %arg6: memref<1x8x8xf32, #tpu.memory_space<vmem>>) attributes {dimension_semantics = [#tpu.dimension_semantics<parallel>], iteration_bounds = array<i64: 1>, scalar_prefetch = 0 : i64, scratch_operands = 0 : i64, tpu.core_type = #tpu.core_type<tc>, window_params = [{transform_indices = @transform_0, window_bounds = array<i64: 1, 8, 64>}, {pipeline_mode = #tpu.pipeline_mode<synchronous>, transform_indices = @transform_1, window_bounds = array<i64: 64, 80>}, {pipeline_mode = #tpu.pipeline_mode<synchronous>, transform_indices = @transform_2, window_bounds = array<i64: 1, 80>}, {transform_indices = @transform_3, window_bounds = array<i64: 2>}, {transform_indices = @transform_4, window_bounds = array<i64: 1, 8, 64>}, {transform_indices = @transform_5, window_bounds = array<i64: 1, 8, 8>}]} {
    %c0 = arith.constant 0 : index
    %c0_0 = arith.constant 0 : index
    %c0_1 = arith.constant 0 : index
    %0 = vector.load %arg1[%c0, %c0_0, %c0_1] : memref<1x8x64xf32, #tpu.memory_space<vmem>>, vector<1x8x64xf32>
    %1 = vector.shape_cast %0 : vector<1x8x64xf32> to vector<8x64xf32>
    %2 = arith.truncf %1 : vector<8x64xf32> to vector<8x64xbf16>
    %c0_2 = arith.constant 0 : index
    %c0_3 = arith.constant 0 : index
    %3 = vector.load %arg2[%c0_2, %c0_3] : memref<64x80xbf16, #tpu.memory_space<vmem>>, vector<64x80xbf16>
    %cst = arith.constant dense<0.000000e+00> : vector<8x80xf32>
    %4 = tpu.matmul %2, %3, %cst {dimension_numbers = #tpu.dot_dimension_numbers<[1], [0], [0], [1], [0, 0, 1, 1], [], []>} : vector<8x64xbf16>, vector<64x80xbf16>, vector<8x80xf32> -> vector<8x80xf32>
    %c0_4 = arith.constant 0 : index
    %c0_5 = arith.constant 0 : index
    %5 = vector.load %arg3[%c0_4, %c0_5] : memref<1x80xf32, #tpu.memory_space<vmem>>, vector<1x80xf32>
    %6 = vector.broadcast %5 : vector<1x80xf32> to vector<8x80xf32>
    %7 = arith.addf %4, %6 : vector<8x80xf32>
    %8 = vector.extract_strided_slice %7 {offsets = [0, 0], sizes = [8, 8], strides = [1, 1]} : vector<8x80xf32> to vector<8x8xf32>
    %9 = vector.extract_strided_slice %7 {offsets = [0, 8], sizes = [8, 8], strides = [1, 1]} : vector<8x80xf32> to vector<8x8xf32>
    %10 = vector.extract_strided_slice %7 {offsets = [0, 16], sizes = [8, 64], strides = [1, 1]} : vector<8x80xf32> to vector<8x64xf32>
    %11 = arith.truncf %8 : vector<8x8xf32> to vector<8x8xbf16>
    %12 = arith.truncf %9 : vector<8x8xf32> to vector<8x8xbf16>
    %cst_6 = arith.constant dense<0.000000e+00> : vector<8x8xf32>
    %13 = tpu.matmul %11, %12, %cst_6 {dimension_numbers = #tpu.dot_dimension_numbers<[1], [1], [0], [0], [0, 0, 1, 0], [], []>} : vector<8x8xbf16>, vector<8x8xbf16>, vector<8x8xf32> -> vector<8x8xf32>
    %cst_7 = arith.constant dense<0xFF800000> : vector<8xf32>
    %14 = vector.multi_reduction <maximumf>, %13, %cst_7 [1] : vector<8x8xf32> to vector<8xf32>
    %15 = vector.shape_cast %14 : vector<8xf32> to vector<8x1xf32>
    %16 = vector.broadcast %15 : vector<8x1xf32> to vector<8x8xf32>
    %17 = arith.subf %13, %16 : vector<8x8xf32>
    %18 = math.exp %17 : vector<8x8xf32>
    %cst_8 = arith.constant dense<0.000000e+00> : vector<8xf32>
    %19 = vector.multi_reduction <add>, %18, %cst_8 [1] : vector<8x8xf32> to vector<8xf32>
    %20 = vector.shape_cast %19 : vector<8xf32> to vector<8x1xf32>
    %21 = tpu.reciprocal %20 {approx = true} : vector<8x1xf32> -> vector<8x1xf32>
    %22 = vector.broadcast %21 : vector<8x1xf32> to vector<8x8xf32>
    %23 = arith.mulf %18, %22 : vector<8x8xf32>
    %c0_9 = arith.constant 0 : index
    %c0_10 = arith.constant 0 : index
    %c0_11 = arith.constant 0 : index
    %24 = vector.load %arg6[%c0_9, %c0_10, %c0_11] : memref<1x8x8xf32, #tpu.memory_space<vmem>>, vector<1x8x8xf32>
    %25 = vector.shape_cast %24 : vector<1x8x8xf32> to vector<8x8xf32>
    %26 = vector.shape_cast %23 : vector<8x8xf32> to vector<1x8x8xf32>
    tpu.vector_store %arg6[%c0_9, %c0_10, %c0_11], %26 {strides = array<i32>} : memref<1x8x8xf32, #tpu.memory_space<vmem>>, vector<1x8x8xf32>,
    %27 = arith.truncf %23 : vector<8x8xf32> to vector<8x8xbf16>
    %28 = arith.truncf %10 : vector<8x64xf32> to vector<8x64xbf16>
    %cst_12 = arith.constant dense<0.000000e+00> : vector<8x64xf32>
    %29 = tpu.matmul %27, %28, %cst_12 {dimension_numbers = #tpu.dot_dimension_numbers<[1], [0], [0], [1], [0, 0, 1, 1], [], []>} : vector<8x8xbf16>, vector<8x64xbf16>, vector<8x64xf32> -> vector<8x64xf32>
    %c0_13 = arith.constant 0 : index
    %30 = memref.load %arg4[%c0_13] : memref<2xf32, #tpu.memory_space<smem>>
    %31 = vector.broadcast %30 : f32 to vector<8x64xf32>
    %32 = arith.mulf %31, %29 : vector<8x64xf32>
    %33 = arith.addf %32, %1 : vector<8x64xf32>
    %c0_14 = arith.constant 0 : index
    %c0_15 = arith.constant 0 : index
    %c0_16 = arith.constant 0 : index
    %34 = vector.load %arg5[%c0_14, %c0_15, %c0_16] : memref<1x8x64xf32, #tpu.memory_space<vmem>>, vector<1x8x64xf32>
    %35 = vector.shape_cast %34 : vector<1x8x64xf32> to vector<8x64xf32>
    %36 = vector.shape_cast %33 : vector<8x64xf32> to vector<1x8x64xf32>
    tpu.vector_store %arg5[%c0_14, %c0_15, %c0_16], %36 {strides = array<i32>} : memref<1x8x64xf32, #tpu.memory_space<vmem>>, vector<1x8x64xf32>,
    return
  }
  func.func @transform_0(%arg0: i32) -> (i32, i32, i32) {
    %c0_i32 = arith.constant 0 : i32
    %c0_i32_0 = arith.constant 0 : i32
    %c0_i32_1 = arith.constant 0 : i32
    return %arg0, %c0_i32, %c0_i32_0 : i32, i32, i32
  }
  func.func @transform_1(%arg0: i32) -> (i32, i32) {
    %c0_i32 = arith.constant 0 : i32
    %c0_i32_0 = arith.constant 0 : i32
    %c0_i32_1 = arith.constant 0 : i32
    return %c0_i32, %c0_i32_0 : i32, i32
  }
  func.func @transform_2(%arg0: i32) -> (i32, i32) {
    %c0_i32 = arith.constant 0 : i32
    %c0_i32_0 = arith.constant 0 : i32
    %c0_i32_1 = arith.constant 0 : i32
    return %c0_i32, %c0_i32_0 : i32, i32
  }
  func.func @transform_3(%arg0: i32) -> i32 {
    %c0_i32 = arith.constant 0 : i32
    %c0_i32_0 = arith.constant 0 : i32
    return %c0_i32 : i32
  }
  func.func @transform_4(%arg0: i32) -> (i32, i32, i32) {
    %c0_i32 = arith.constant 0 : i32
    %c0_i32_0 = arith.constant 0 : i32
    %c0_i32_1 = arith.constant 0 : i32
    return %arg0, %c0_i32, %c0_i32_0 : i32, i32, i32
  }
  func.func @transform_5(%arg0: i32) -> (i32, i32, i32) {
    %c0_i32 = arith.constant 0 : i32
    %c0_i32_0 = arith.constant 0 : i32
    %c0_i32_1 = arith.constant 0 : i32
    return %arg0, %c0_i32, %c0_i32_0 : i32, i32, i32
  }
}

</mosaic_0001>

<llo_original>
// kernel: tpu_custom_call.1
$region0: #{tpu_custom_call.1}
  #allocation0 [shape = 'u32[]', space=smem, size = 0x4, offset = 0x4, fixed_abs, tag = 'smem constant byte address 0x4 - core index']
  #allocation1 [shape = 'u32[144,128]{1,0:T(1,128)}', space=vmem, size = 0x12000, scoped, tag = 'internal scratch']
  %s0 = inlined_call_operand.hbm [shape: f32[1,8,64], index: 0, kind: input, shape index: {}]
  %s1 = inlined_call_operand.hbm [shape: bf16[64,80], index: 1, kind: input, shape index: {}]
  %s2 = inlined_call_operand.vmem [shape: f32[1,80], index: 2, kind: input, shape index: {}]
  %s3 = inlined_call_operand.vmem [shape: f32[2], index: 3, kind: input, shape index: {}]
  %s4 = inlined_call_operand.hbm [shape: f32[1,8,64], index: 4, kind: output, shape index: {0}]
  %s5 = inlined_call_operand.hbm [shape: f32[1,8,8], index: 5, kind: output, shape index: {1}]
  %6 = xla_tuple %s4, %s5
  %s7 = sld [smem:[#allocation0]]
  $region46: #{tpu_custom_call.1} parent=0
    _
  %s9 = ssub.s32 1, %s7
  %s10 = scalar_select 0, %s9, %s7
  $region1: #{tpu_custom_call.1} parent=0
    #allocation2 [shape = 'u8[4096]{0}', space=vmem, size = 0x1000, scoped, tag = 'input window, operand 0, single buffered']
    #allocation3 [shape = 's32[1]{0}', space=sflag, size = 0x4, scoped, tag = 'scoped memory for tpu_custom_call.1']
    #allocation4 [shape = 's32[1]{0}', space=sflag, size = 0x4, scoped, tag = 'scoped memory for tpu_custom_call.1']
    #allocation5 [shape = 's32[1]{0}', space=sflag, size = 0x4, scoped, tag = 'scoped memory for tpu_custom_call.1']
    #allocation6 [shape = 'u8[16384]{0}', space=vmem, size = 0x4000, scoped, tag = 'input window, operand 1, single buffered']
    #allocation7 [shape = 's32[1]{0}', space=sflag, size = 0x4, scoped, tag = 'scoped memory for tpu_custom_call.1']
    #allocation8 [shape = 'u8[512]{0}', space=smem, size = 0x200, scoped, tag = 'input window, operand 3, single buffered']
    #allocation9 [shape = 'u8[4096]{0}', space=vmem, size = 0x1000, scoped, tag = 'output window, operand 0, single buffered']
    #allocation10 [shape = 'u8[4096]{0}', space=vmem, size = 0x1000, scoped, tag = 'output window, operand 1, single buffered']
    #allocation11 [shape = 's32[1]{0}', space=sflag, size = 0x4, scoped, tag = 'scoped memory for tpu_custom_call.1']
    %11 = vsyncpa [#allocation3], 0
    %12 = vsyncpa [#allocation7], 0
    %13 = vsyncpa [#allocation5], 0
    %14 = vsyncpa [#allocation4], 0
    %15 = vsyncpa [#allocation11], 0
    // Predicated region
    $region2: #{tpu_custom_call.1} parent=1 // pred_check
      _
    $region3: #{tpu_custom_call.1} parent=1 // pred_check_branch
      %17 = sbr.rel (0) target = $region5
    $region4: #{tpu_custom_call.1} parent=1 // pred_region
      %s19 = ssub.s32 128, 128
      %20 = vsyncadd [#allocation3], %s19
      %s22 = sshll.u32 [#allocation2], 4
      %s23 = int_to_ptr.vmem [resolvable:$true] %s22
      %25 = dma.hbm_to_vmem [thread:$0]  %s0, 128, %s23, [#allocation3]
    $region5: #{tpu_custom_call.1} parent=1 // pred_fallthru
      _
    // Predicated region
    $region6: #{tpu_custom_call.1} parent=1 // pred_check
      _
    $region7: #{tpu_custom_call.1} parent=1 // pred_check_branch
      %27 = sbr.rel (0) target = $region9
    $region8: #{tpu_custom_call.1} parent=1 // pred_region
      %s29 = ssub.s32 512, 512
      %30 = vsyncadd [#allocation7], %s29
      %s31 = sshll.u32 [#allocation6], 4
      %s32 = int_to_ptr.vmem [resolvable:$true] %s31
      %37 = dma.hbm_to_vmem [thread:$0]  %s1, 512, %s32, [#allocation7], 64, 64, 4
    $region9: #{tpu_custom_call.1} parent=1 // pred_fallthru
      _
    // Predicated region
    $region10: #{tpu_custom_call.1} parent=1 // pred_check
      _
    $region11: #{tpu_custom_call.1} parent=1 // pred_check_branch
      %39 = sbr.rel (0) target = $region13
    $region12: #{tpu_custom_call.1} parent=1 // pred_region
      _
    $region13: #{tpu_custom_call.1} parent=1 // pred_fallthru
      _
    // Predicated region
    $region14: #{tpu_custom_call.1} parent=1 // pred_check
      _
    $region15: #{tpu_custom_call.1} parent=1 // pred_check_branch
      %41 = sbr.rel (0) target = $region17
    $region16: #{tpu_custom_call.1} parent=1 // pred_region
      %s43 = ssub.s32 16, 16
      %44 = vsyncadd [#allocation5], %s43
      %s46 = sshll.u32 %s3, 4
      %s47 = int_to_ptr.vmem [resolvable:$true] %s46
      %49 = dma.vmem_to_smem %s47, 16, [#allocation8], [#allocation5]
    $region17: #{tpu_custom_call.1} parent=1 // pred_fallthru
      _
    // Predicated region
    $region18: #{tpu_custom_call.1} parent=1 // pred_check
      _
    $region19: #{tpu_custom_call.1} parent=1 // pred_check_branch
      %51 = sbr.rel (0) target = $region21
    $region20: #{tpu_custom_call.1} parent=1 // pred_region
      %52 = dma.done [#allocation3], 128
    $region21: #{tpu_custom_call.1} parent=1 // pred_fallthru
      _
    // Predicated region
    $region22: #{tpu_custom_call.1} parent=1 // pred_check
      _
    $region23: #{tpu_custom_call.1} parent=1 // pred_check_branch
      %54 = sbr.rel (0) target = $region25
    $region24: #{tpu_custom_call.1} parent=1 // pred_region
      %55 = dma.done [#allocation7], 512
    $region25: #{tpu_custom_call.1} parent=1 // pred_fallthru
      _
    // Predicated region
    $region26: #{tpu_custom_call.1} parent=1 // pred_check
      _
    $region27: #{tpu_custom_call.1} parent=1 // pred_check_branch
      %57 = sbr.rel (0) target = $region29
    $region28: #{tpu_custom_call.1} parent=1 // pred_region
      %58 = dma.done [#allocation5], 16
    $region29: #{tpu_custom_call.1} parent=1 // pred_fallthru
      _
    %59 = sfence
    %v61 = vld [vmem:[#allocation2] sm:$0xff]
    %v62 = vpack.c.bf16 %v61, %v61
    %v63 = vld [vmem:[#allocation6] sm:$0xf]
    %v64 = vld [vmem:[#allocation6 + $0x4] sm:$0xf]
    %v65 = vld [vmem:[#allocation6 + $0x8] sm:$0xf]
    %v66 = vld [vmem:[#allocation6 + $0xc] sm:$0xf]
    %v67 = vld [vmem:[#allocation6 + $0x10] sm:$0xf]
    %v68 = vld [vmem:[#allocation6 + $0x14] sm:$0xf]
    %v69 = vld [vmem:[#allocation6 + $0x18] sm:$0xf]
    %v70 = vld [vmem:[#allocation6 + $0x1c] sm:$0xf]
    %v71 = vld [vmem:[%s2] sm:$0x1]
    %v73 = vlaneseq
    %v74 = vshrl.u32 %v73, 7
    %v75 = vsub.s32 0, %v74
    %v76 = vrot.slane %v71, %v75
    %v86 = vunpack.c.l.b16 %v63
    %v87 = vunpack.c.l.b16 %v64
    %v88 = vunpack.c.l.b16 %v65
    %v89 = vunpack.c.l.b16 %v66
    %v90 = vunpack.c.l.b16 %v67
    %v91 = vunpack.c.l.b16 %v68
    %v92 = vunpack.c.l.b16 %v69
    %v93 = vunpack.c.l.b16 %v70
    %v94 = vpack.c.b16 %v87, %v86
    %v95 = vpack.c.b16 %v89, %v88
    %v96 = vpack.c.b16 %v91, %v90
    %v97 = vpack.c.b16 %v93, %v92
    %vm102 = vcmask 523264
    %v104 = vsel %vm102, %v62, 0
    %106 = vmatprep.subr.bf16.mxu0 0
    %107 = vmatpush1.bf16.msra.mxu0 %v94
    %108 = vmatprep.subr.bf16.mxu0 0
    %109 = vmatpush1.bf16.msra.mxu0 %v95
    %110 = vmatprep.subr.bf16.mxu0 0
    %111 = vmatpush1.bf16.msra.mxu0 %v96
    %112 = vmatprep.subr.bf16.mxu0 0
    %113 = vmatpush1.bf16.msra.mxu0 %v97
    %114 = vmatprep.subr.bf16.mxu0 0
    %115 = vmatpush1.bf16.msra.mxu0 0
    %116 = vmatprep.subr.bf16.mxu0 0
    %117 = vmatpush1.bf16.msra.mxu0 0
    %118 = vmatprep.subr.bf16.mxu0 0
    %119 = vmatpush1.bf16.msra.mxu0 0
    %120 = vmatprep.subr.bf16.mxu0 0
    %121 = vmatpush1.bf16.msra.mxu0 0
    %122 = vmatprep.subr.bf16.mxu0 0
    %123 = vmatpush1.bf16.msra.mxu0 0
    %124 = vmatprep.subr.bf16.mxu0 0
    %125 = vmatpush1.bf16.msra.mxu0 0
    %126 = vmatprep.subr.bf16.mxu0 0
    %127 = vmatpush1.bf16.msra.mxu0 0
    %128 = vmatprep.subr.bf16.mxu0 0
    %129 = vmatpush1.bf16.msra.mxu0 0
    %130 = vmatprep.subr.bf16.mxu0 0
    %131 = vmatpush1.bf16.msra.mxu0 0
    %132 = vmatprep.subr.bf16.mxu0 0
    %133 = vmatpush1.bf16.msra.mxu0 0
    %134 = vmatprep.subr.bf16.mxu0 0
    %135 = vmatpush1.bf16.msra.mxu0 0
    %136 = vmatprep.subr.bf16.mxu0 0
    %137 = vmatpush1.bf16.msra.mxu0 0
    %138 = vmatprep.mubr.bf16.mxu0 0
    %139 = vmatmul.mubr.bf16.gmra.mrb[0].mxu0 %v104
    %v140 = vpop.f32.mrb[0].mxu0
    %v141 = vadd.f32 %v76, %v140
    %v142 = vpop.f32.mrb[0].mxu0
    %v143 = vpop.f32.mrb[0].mxu0
    %v144 = vpop.f32.mrb[0].mxu0
    %145 = vdwg.mxu0
    %v146 = vpack.c.bf16 %v141, %v141
    %148 = vrot.lane.b32.xlu0 %v146, 120
    %v149 = vpop.permute.xlu0 %148
    %vm150 = vcmask 64512
    %v152 = vsel %vm150, %v146, 0
    %v155 = vsel %vm150, %v149, 0
    %157 = vmatprep.subr.bf16.mxu0 0
    %158 = vmatpush1.bf16.xpose.msra.mxu0 %v155
    %159 = vmatprep.subr.bf16.mxu0 0
    %160 = vmatpush1.bf16.xpose.msra.mxu0 0
    %161 = vmatprep.subr.bf16.mxu0 0
    %162 = vmatpush1.bf16.xpose.msra.mxu0 0
    %163 = vmatprep.subr.bf16.mxu0 0
    %164 = vmatpush1.bf16.xpose.msra.mxu0 0
    %165 = vmatprep.subr.bf16.mxu0 0
    %166 = vmatpush1.bf16.xpose.msra.mxu0 0
    %167 = vmatprep.subr.bf16.mxu0 0
    %168 = vmatpush1.bf16.xpose.msra.mxu0 0
    %169 = vmatprep.subr.bf16.mxu0 0
    %170 = vmatpush1.bf16.xpose.msra.mxu0 0
    %171 = vmatprep.subr.bf16.mxu0 0
    %172 = vmatpush1.bf16.xpose.msra.mxu0 0
    %173 = vmatprep.subr.bf16.mxu0 0
    %174 = vmatpush1.bf16.xpose.msra.mxu0 0
    %175 = vmatprep.subr.bf16.mxu0 0
    %176 = vmatpush1.bf16.xpose.msra.mxu0 0
    %177 = vmatprep.subr.bf16.mxu0 0
    %178 = vmatpush1.bf16.xpose.msra.mxu0 0
    %179 = vmatprep.subr.bf16.mxu0 0
    %180 = vmatpush1.bf16.xpose.msra.mxu0 0
    %181 = vmatprep.subr.bf16.mxu0 0
    %182 = vmatpush1.bf16.xpose.msra.mxu0 0
    %183 = vmatprep.subr.bf16.mxu0 0
    %184 = vmatpush1.bf16.xpose.msra.mxu0 0
    %185 = vmatprep.subr.bf16.mxu0 0
    %186 = vmatpush1.bf16.xpose.msra.mxu0 0
    %187 = vmatprep.subr.bf16.mxu0 0
    %188 = vmatpush1.bf16.xpose.msra.mxu0 0
    %189 = vmatprep.mubr.bf16.mxu0 0
    %190 = vmatmul.mubr.bf16.gmra.mrb[0].mxu0 %v152
    %v191 = vpop.f32.mrb[0].mxu0
    %v192 = vadd.f32 0.0, %v191
    %v193 = vpop.f32.mrb[0].mxu0
    %v194 = vpop.f32.mrb[0].mxu0
    %v195 = vpop.f32.mrb[0].mxu0
    %196 = vdwg.mxu0
    %v197 = vsel %vm150, %v192, -inf
    %198 = vmax.xlane.f32.xlu0 %v197
    %v199 = vpop.xlane.xlu0 %198
    %v200 = vsub.f32 %v192, %v199
    %v201 = vmul.f32 %v200, 1.442695
    %v202 = vpow.pop %v201
    %v203 = vsel %vm150, %v202, 0.0
    %204 = vadd.xlane.f32.xlu0 %v203
    %v205 = vpop.xlane.xlu0 %204
    %v206 = vrcp.pop %v205
    %v207 = vmul.f32 %v202, %v206
    %208 = vst.msk [vmem:[#allocation10] sm:$0xff] %vm150, %v207
    %v209 = vpack.c.bf16 %v207, %v207
    %210 = vrot.lane.b32.xlu0 %v146, 112
    %v211 = vpop.permute.xlu0 %210
    %v213 = vsel %vm150, %v209, 0
    %vm215 = vcmask 1043456
    %v217 = vsel %vm215, %v211, 0
    %219 = vmatprep.subr.bf16.mxu0 0
    %220 = vmatpush1.bf16.msra.mxu0 %v217
    %221 = vmatprep.subr.bf16.mxu0 0
    %222 = vmatpush1.bf16.msra.mxu0 0
    %223 = vmatprep.subr.bf16.mxu0 0
    %224 = vmatpush1.bf16.msra.mxu0 0
    %225 = vmatprep.subr.bf16.mxu0 0
    %226 = vmatpush1.bf16.msra.mxu0 0
    %227 = vmatprep.subr.bf16.mxu0 0
    %228 = vmatpush1.bf16.msra.mxu0 0
    %229 = vmatprep.subr.bf16.mxu0 0
    %230 = vmatpush1.bf16.msra.mxu0 0
    %231 = vmatprep.subr.bf16.mxu0 0
    %232 = vmatpush1.bf16.msra.mxu0 0
    %233 = vmatprep.subr.bf16.mxu0 0
    %234 = vmatpush1.bf16.msra.mxu0 0
    %235 = vmatprep.subr.bf16.mxu0 0
    %236 = vmatpush1.bf16.msra.mxu0 0
    %237 = vmatprep.subr.bf16.mxu0 0
    %238 = vmatpush1.bf16.msra.mxu0 0
    %239 = vmatprep.subr.bf16.mxu0 0
    %240 = vmatpush1.bf16.msra.mxu0 0
    %241 = vmatprep.subr.bf16.mxu0 0
    %242 = vmatpush1.bf16.msra.mxu0 0
    %243 = vmatprep.subr.bf16.mxu0 0
    %244 = vmatpush1.bf16.msra.mxu0 0
    %245 = vmatprep.subr.bf16.mxu0 0
    %246 = vmatpush1.bf16.msra.mxu0 0
    %247 = vmatprep.subr.bf16.mxu0 0
    %248 = vmatpush1.bf16.msra.mxu0 0
    %249 = vmatprep.subr.bf16.mxu0 0
    %250 = vmatpush1.bf16.msra.mxu0 0
    %251 = vmatprep.mubr.bf16.mxu0 0
    %252 = vmatmul.mubr.bf16.gmra.mrb[0].mxu0 %v213
    %v253 = vpop.f32.mrb[0].mxu0
    %v254 = vadd.f32 0.0, %v253
    %v255 = vpop.f32.mrb[0].mxu0
    %v256 = vpop.f32.mrb[0].mxu0
    %v257 = vpop.f32.mrb[0].mxu0
    %258 = vdwg.mxu0
    %s259 = sld [smem:[#allocation8]]
    %v260 = vstv %s259
    %v261 = vmul.f32 %v260, %v254
    %v262 = vadd.f32 %v261, %v61
    %263 = vst.msk [vmem:[#allocation9] sm:$0xff] %vm102, %v262
    // Predicated region
    $region30: #{tpu_custom_call.1} parent=1 // pred_check
      _
    $region31: #{tpu_custom_call.1} parent=1 // pred_check_branch
      %265 = sbr.rel (0) target = $region33
    $region32: #{tpu_custom_call.1} parent=1 // pred_region
      %s267 = ssub.s32 128, 128
      %268 = vsyncadd [#allocation4], %s267
      %s270 = sshll.u32 [#allocation9], 4
      %s271 = int_to_ptr.vmem [resolvable:$true] %s270
      %273 = dma.vmem_to_hbm [thread:$0]  %s271, 128, %s4, [#allocation4]
    $region33: #{tpu_custom_call.1} parent=1 // pred_fallthru
      _
    // Predicated region
    $region34: #{tpu_custom_call.1} parent=1 // pred_check
      _
    $region35: #{tpu_custom_call.1} parent=1 // pred_check_branch
      %275 = sbr.rel (0) target = $region37
    $region36: #{tpu_custom_call.1} parent=1 // pred_region
      %s277 = ssub.s32 128, 128
      %278 = vsyncadd [#allocation11], %s277
      %s280 = sshll.u32 [#allocation10], 4
      %s281 = int_to_ptr.vmem [resolvable:$true] %s280
      %283 = dma.vmem_to_hbm [thread:$0]  %s281, 128, %s5, [#allocation11]
    $region37: #{tpu_custom_call.1} parent=1 // pred_fallthru
      _
    // Predicated region
    $region38: #{tpu_custom_call.1} parent=1 // pred_check
      _
    $region39: #{tpu_custom_call.1} parent=1 // pred_check_branch
      %285 = sbr.rel (0) target = $region41
    $region40: #{tpu_custom_call.1} parent=1 // pred_region
      %286 = dma.done [#allocation4], 128
    $region41: #{tpu_custom_call.1} parent=1 // pred_fallthru
      _
    // Predicated region
    $region42: #{tpu_custom_call.1} parent=1 // pred_check
      _
    $region43: #{tpu_custom_call.1} parent=1 // pred_check_branch
      %288 = sbr.rel (0) target = $region45
    $region44: #{tpu_custom_call.1} parent=1 // pred_region
      %289 = dma.done [#allocation11], 128
    $region45: #{tpu_custom_call.1} parent=1 // pred_fallthru
      _
    %290 = vsyncpa [#allocation3], 1
    %291 = vsyncpa [#allocation7], 1
    %292 = vsyncpa [#allocation4], 1
    %293 = vsyncpa [#allocation11], 1
    %294 = vsyncpa [#allocation5], 1

</llo_original>
